<compile_context>
chip_gen: v5e
topology: v5e:2x2
jax: 0.10.0
libtpu: 0.0.40
codegen_flags: <defaults>
</compile_context>

<pallas_src>
import jax
import jax.numpy as jnp
from jax.experimental import pallas as pl
from jax.experimental.pallas import tpu as pltpu

C = 10        # output classes (fixed by the reference module)
LANE = 128    # vreg lane width
SUBLANE = 8   # vreg sublane count (f32)


def _round_up(n, m):
    return ((n + m - 1) // m) * m


def _pad2d(arr, rows, cols):
    r, c = arr.shape
    return jnp.pad(arr, ((0, rows - r), (0, cols - c)))


def gnn_kernel(a_ref, x_ref, w1_ref, b1_ref, w2_ref, b2_ref, out_ref):
    a = a_ref[...]  # bf16 [Np, Np] adjacency (exact: small integer edge counts)

    # ---- layer 1: relu(A @ (X @ W1) + b1) -----------------------------------
    # bf16 MXU inputs, f32 accumulation.
    xw1 = jnp.dot(x_ref[...], w1_ref[...], preferred_element_type=jnp.float32)
    h = jnp.dot(a, xw1.astype(jnp.bfloat16), preferred_element_type=jnp.float32)
    h = jnp.maximum(h + b1_ref[...], 0.0)  # bias + ReLU in f32 (v5e-safe VPU path)
    # F.dropout(p=0.5, training=False) is identity in eval mode.

    # ---- layer 2: A @ (H @ W2) + b2 ------------------------------------------
    hw2 = jnp.dot(h.astype(jnp.bfloat16), w2_ref[...], preferred_element_type=jnp.float32)
    out_ref[...] = (
        jnp.dot(a, hw2.astype(jnp.bfloat16), preferred_element_type=jnp.float32)
        + b2_ref[...]
    )


def gnn_forward(a, x, w1, b1, w2, b2):
    n, f_in = x.shape
    hid = w1.shape[1]
    c_out = w2.shape[1]

    # Padded sizes: node dim to a sublane multiple, feature dims to full lanes.
    np_ = _round_up(max(n, SUBLANE), SUBLANE)
    fp = _round_up(f_in, LANE)
    hp = _round_up(hid, LANE)
    cp = _round_up(c_out, LANE)

    # Zero-padding keeps results exact: padded W1/b1 columns give zeros through
    # ReLU, padded W2 rows multiply those zeros, padded A columns are zero so
    # padded node rows never contribute to real rows.  The padded output rows /
    # columns are sliced off below.
    a_p = _pad2d(a, np_, np_).astype(jnp.bfloat16)
    x_p = _pad2d(x, np_, fp).astype(jnp.bfloat16)
    w1_p = _pad2d(w1, fp, hp).astype(jnp.bfloat16)
    w2_p = _pad2d(w2, hp, cp).astype(jnp.bfloat16)
    b1_p = _pad2d(b1.reshape(1, -1).astype(jnp.float32), 1, hp)
    b2_p = _pad2d(b2.reshape(1, -1).astype(jnp.float32), 1, cp)

    full_spec = lambda shape: pl.BlockSpec(shape, lambda: (0,) * len(shape))

    flops = 2 * (np_ * fp * hp + np_ * np_ * hp + np_ * hp * cp + np_ * np_ * cp)
    bytes_accessed = (
        sum(z.size * z.dtype.itemsize for z in (a_p, x_p, w1_p, b1_p, w2_p, b2_p))
        + np_ * cp * 4
    )

    out_p = pl.pallas_call(
        gnn_kernel,
        out_shape=jax.ShapeDtypeStruct((np_, cp), jnp.float32),
        in_specs=[
            full_spec(a_p.shape),
            full_spec(x_p.shape),
            full_spec(w1_p.shape),
            full_spec(b1_p.shape),
            full_spec(w2_p.shape),
            full_spec(b2_p.shape),
        ],
        out_specs=full_spec((np_, cp)),
        compiler_params=pltpu.CompilerParams(vmem_limit_bytes=16 * 1024 * 1024),
        cost_estimate=pl.CostEstimate(
            flops=flops, transcendentals=0, bytes_accessed=bytes_accessed
        ),
    )(a_p, x_p, w1_p, b1_p, w2_p, b2_p)

    return out_p[:n, :c_out]


def glorot(key, fan_in, fan_out):
    # matches torch_geometric glorot init (uniform(-a, a), a = sqrt(6/(fi+fo)))
    a = jnp.sqrt(6.0 / (fan_in + fan_out))
    return jax.random.uniform(
        key, (fan_in, fan_out), dtype=jnp.float32, minval=-a, maxval=a
    )


def dense_adjacency(edge_index, num_nodes):
    # A[dst, src] accumulates 1 per edge; GCN message passing out[dst] += x[src]
    src, dst = edge_index[0], edge_index[1]
    a = jnp.zeros((num_nodes, num_nodes), dtype=jnp.float32)
    return a.at[dst, src].add(1.0)


def reference_forward(a, x, w1, b1, w2, b2, cast_bf16=False):
    bf = (lambda t: t.astype(jnp.bfloat16)) if cast_bf16 else (lambda t: t)
    xw1 = jnp.dot(bf(x), bf(w1), preferred_element_type=jnp.float32)
    h = jnp.dot(bf(a), bf(xw1), preferred_element_type=jnp.float32) + b1
    h = jnp.maximum(h, 0.0)
    hw2 = jnp.dot(bf(h), bf(w2), preferred_element_type=jnp.float32)
    return jnp.dot(bf(a), bf(hw2), preferred_element_type=jnp.float32) + b2


if __name__ == "__main__":
    key = jax.random.PRNGKey(0)
    k_x, k_e, k_w1, k_w2 = jax.random.split(key, 4)

    N = 16          # number of nodes
    F_IN = 10       # GCNConv(10, hidden)
    HIDDEN = 32     # hidden_channels
    E = 40          # number of edges

    # deterministic inputs
    x = jax.random.normal(k_x, (N, F_IN), dtype=jnp.float32)
    edge_index = jax.random.randint(k_e, (2, E), minval=0, maxval=N, dtype=jnp.int32)
    a = dense_adjacency(edge_index, N)

    # deterministic parameters (glorot weights, zero biases — GCNConv init)
    w1 = glorot(k_w1, F_IN, HIDDEN)
    b1 = jnp.zeros((1, HIDDEN), dtype=jnp.float32)
    w2 = glorot(k_w2, HIDDEN, C)
    b2 = jnp.zeros((1, C), dtype=jnp.float32)

    out = jax.block_until_ready(gnn_forward(a, x, w1, b1, w2, b2))
    assert out.shape == (N, C)

    # matched-precision reference (same bf16 casts at the MXU inputs)
    ref_bf16 = reference_forward(a, x, w1, b1, w2, b2, cast_bf16=True)
    assert jnp.allclose(out, ref_bf16, atol=2e-3, rtol=2e-3), "mismatch vs bf16-matched ref"

    # full-f32 reference: kernel differs only by bf16 input rounding
    ref_f32 = reference_forward(a, x, w1, b1, w2, b2, cast_bf16=False)
    assert jnp.allclose(out, ref_f32, atol=8e-2, rtol=8e-2), "mismatch vs f32 ref"

    print("KERNEL_OK")
</pallas_src>

<mosaic_0001>
module attributes {stable_mosaic.version = 11 : i64} {
  func.func @gnn_kernel(%arg0: memref<16x16xbf16, #tpu.memory_space<vmem>>, %arg1: memref<16x128xbf16, #tpu.memory_space<vmem>>, %arg2: memref<128x128xbf16, #tpu.memory_space<vmem>>, %arg3: memref<1x128xf32, #tpu.memory_space<vmem>>, %arg4: memref<128x128xbf16, #tpu.memory_space<vmem>>, %arg5: memref<1x128xf32, #tpu.memory_space<vmem>>, %arg6: memref<16x128xf32, #tpu.memory_space<vmem>>) attributes {dimension_semantics = [], scalar_prefetch = 0 : i64, scratch_operands = 0 : i64, tpu.core_type = #tpu.core_type<tc>} {
    %c0 = arith.constant 0 : index
    %c0_0 = arith.constant 0 : index
    %0 = vector.load %arg0[%c0, %c0_0] : memref<16x16xbf16, #tpu.memory_space<vmem>>, vector<16x16xbf16>
    %c0_1 = arith.constant 0 : index
    %c0_2 = arith.constant 0 : index
    %1 = vector.load %arg1[%c0_1, %c0_2] : memref<16x128xbf16, #tpu.memory_space<vmem>>, vector<16x128xbf16>
    %c0_3 = arith.constant 0 : index
    %c0_4 = arith.constant 0 : index
    %2 = vector.load %arg2[%c0_3, %c0_4] : memref<128x128xbf16, #tpu.memory_space<vmem>>, vector<128x128xbf16>
    %cst = arith.constant dense<0.000000e+00> : vector<16x128xf32>
    %3 = tpu.matmul %1, %2, %cst {dimension_numbers = #tpu.dot_dimension_numbers<[1], [0], [0], [1], [0, 0, 1, 1], [], []>} : vector<16x128xbf16>, vector<128x128xbf16>, vector<16x128xf32> -> vector<16x128xf32>
    %4 = arith.truncf %3 : vector<16x128xf32> to vector<16x128xbf16>
    %cst_5 = arith.constant dense<0.000000e+00> : vector<16x128xf32>
    %5 = tpu.matmul %0, %4, %cst_5 {dimension_numbers = #tpu.dot_dimension_numbers<[1], [0], [0], [1], [0, 0, 1, 1], [], []>} : vector<16x16xbf16>, vector<16x128xbf16>, vector<16x128xf32> -> vector<16x128xf32>
    %c0_6 = arith.constant 0 : index
    %c0_7 = arith.constant 0 : index
    %6 = vector.load %arg3[%c0_6, %c0_7] : memref<1x128xf32, #tpu.memory_space<vmem>>, vector<1x128xf32>
    %7 = vector.broadcast %6 : vector<1x128xf32> to vector<16x128xf32>
    %8 = arith.addf %5, %7 : vector<16x128xf32>
    %cst_8 = arith.constant 0.000000e+00 : f32
    %9 = vector.broadcast %cst_8 : f32 to vector<16x128xf32>
    %10 = arith.maximumf %8, %9 : vector<16x128xf32>
    %11 = arith.truncf %10 : vector<16x128xf32> to vector<16x128xbf16>
    %c0_9 = arith.constant 0 : index
    %c0_10 = arith.constant 0 : index
    %12 = vector.load %arg4[%c0_9, %c0_10] : memref<128x128xbf16, #tpu.memory_space<vmem>>, vector<128x128xbf16>
    %cst_11 = arith.constant dense<0.000000e+00> : vector<16x128xf32>
    %13 = tpu.matmul %11, %12, %cst_11 {dimension_numbers = #tpu.dot_dimension_numbers<[1], [0], [0], [1], [0, 0, 1, 1], [], []>} : vector<16x128xbf16>, vector<128x128xbf16>, vector<16x128xf32> -> vector<16x128xf32>
    %14 = arith.truncf %13 : vector<16x128xf32> to vector<16x128xbf16>
    %cst_12 = arith.constant dense<0.000000e+00> : vector<16x128xf32>
    %15 = tpu.matmul %0, %14, %cst_12 {dimension_numbers = #tpu.dot_dimension_numbers<[1], [0], [0], [1], [0, 0, 1, 1], [], []>} : vector<16x16xbf16>, vector<16x128xbf16>, vector<16x128xf32> -> vector<16x128xf32>
    %c0_13 = arith.constant 0 : index
    %c0_14 = arith.constant 0 : index
    %16 = vector.load %arg5[%c0_13, %c0_14] : memref<1x128xf32, #tpu.memory_space<vmem>>, vector<1x128xf32>
    %17 = vector.broadcast %16 : vector<1x128xf32> to vector<16x128xf32>
    %18 = arith.addf %15, %17 : vector<16x128xf32>
    %c0_15 = arith.constant 0 : index
    %c0_16 = arith.constant 0 : index
    %19 = vector.load %arg6[%c0_15, %c0_16] : memref<16x128xf32, #tpu.memory_space<vmem>>, vector<16x128xf32>
    tpu.vector_store %arg6[%c0_15, %c0_16], %18 {strides = array<i32>} : memref<16x128xf32, #tpu.memory_space<vmem>>, vector<16x128xf32>,
    return
  }
}

</mosaic_0001>

<llo_original>
// kernel: tpu_custom_call.1
$region0: #{tpu_custom_call.1}
  #allocation0 [shape = 'u32[]', space=smem, size = 0x4, offset = 0x4, fixed_abs, tag = 'smem constant byte address 0x4 - core index']
  #allocation1 [shape = 'u32[72,128]{1,0:T(1,128)}', space=vmem, size = 0x9000, scoped, tag = 'internal scratch']
  %s0 = inlined_call_operand.hbm [shape: bf16[16,16], index: 0, kind: input, shape index: {}]
  %s1 = inlined_call_operand.hbm [shape: bf16[16,128], index: 1, kind: input, shape index: {}]
  %s2 = inlined_call_operand.hbm [shape: bf16[128,128], index: 2, kind: input, shape index: {}]
  %s3 = inlined_call_operand.vmem [shape: f32[1,128], index: 3, kind: input, shape index: {}]
  %s4 = inlined_call_operand.hbm [shape: bf16[128,128], index: 4, kind: input, shape index: {}]
  %s5 = inlined_call_operand.vmem [shape: f32[1,128], index: 5, kind: input, shape index: {}]
  %s6 = inlined_call_operand.hbm [shape: f32[16,128], index: 6, kind: output, shape index: {}]
  %s7 = sld [smem:[#allocation0]]
  $region50: #{tpu_custom_call.1} parent=0
    _
  %s9 = ssub.s32 1, %s7
  %s10 = scalar_select 0, %s9, %s7
  $region1: #{tpu_custom_call.1} parent=0
    #allocation2 [shape = 'u8[4096]{0}', space=vmem, size = 0x1000, scoped, tag = 'input window, operand 0, single buffered']
    #allocation3 [shape = 's32[1]{0}', space=sflag, size = 0x4, scoped, tag = 'scoped memory for tpu_custom_call.1']
    #allocation4 [shape = 's32[1]{0}', space=sflag, size = 0x4, scoped, tag = 'scoped memory for tpu_custom_call.1']
    #allocation5 [shape = 'u8[4096]{0}', space=vmem, size = 0x1000, scoped, tag = 'input window, operand 1, single buffered']
    #allocation6 [shape = 's32[1]{0}', space=sflag, size = 0x4, scoped, tag = 'scoped memory for tpu_custom_call.1']
    #allocation7 [shape = 'u8[32768]{0}', space=vmem, size = 0x8000, scoped, tag = 'input window, operand 2, single buffered']
    #allocation8 [shape = 'u8[32768]{0}', space=vmem, size = 0x8000, scoped, tag = 'input window, operand 4, single buffered']
    #allocation9 [shape = 's32[1]{0}', space=sflag, size = 0x4, scoped, tag = 'scoped memory for tpu_custom_call.1']
    #allocation10 [shape = 'u8[8192]{0}', space=vmem, size = 0x2000, scoped, tag = 'output window, operand 0, single buffered']
    %11 = vsyncpa [#allocation3], 0
    %12 = vsyncpa [#allocation6], 0
    %13 = vsyncpa [#allocation9], 0
    %14 = vsyncpa [#allocation4], 0
    // Predicated region
    $region2: #{tpu_custom_call.1} parent=1 // pred_check
      _
    $region3: #{tpu_custom_call.1} parent=1 // pred_check_branch
      %16 = sbr.rel (0) target = $region5
    $region4: #{tpu_custom_call.1} parent=1 // pred_region
      %18 = vsyncadd [#allocation3], 0
      %s19 = sshll.u32 %s0, 4
      %s20 = int_to_ptr.hbm [resolvable:$true] %s19
      %s21 = sshll.u32 [#allocation2], 4
      %s22 = int_to_ptr.vmem [resolvable:$true] %s21
      %27 = dma.hbm_to_vmem [thread:$0]  %s20, 128, %s22, [#allocation3], 64, 64, 4
    $region5: #{tpu_custom_call.1} parent=1 // pred_fallthru
      _
    // Predicated region
    $region6: #{tpu_custom_call.1} parent=1 // pred_check
      _
    $region7: #{tpu_custom_call.1} parent=1 // pred_check_branch
      %29 = sbr.rel (0) target = $region9
    $region8: #{tpu_custom_call.1} parent=1 // pred_region
      %31 = vsyncadd [#allocation6], 0
      %s32 = sshll.u32 %s1, 4
      %s33 = int_to_ptr.hbm [resolvable:$true] %s32
      %s34 = sshll.u32 [#allocation5], 4
      %s35 = int_to_ptr.vmem [resolvable:$true] %s34
      %40 = dma.hbm_to_vmem [thread:$0]  %s33, 128, %s35, [#allocation6], 64, 64, 4
    $region9: #{tpu_custom_call.1} parent=1 // pred_fallthru
      _
    // Predicated region
    $region10: #{tpu_custom_call.1} parent=1 // pred_check
      _
    $region11: #{tpu_custom_call.1} parent=1 // pred_check_branch
      %42 = sbr.rel (0) target = $region13
    $region12: #{tpu_custom_call.1} parent=1 // pred_region
      %44 = vsyncadd [#allocation6], 0
      %s45 = sshll.u32 %s2, 4
      %s46 = int_to_ptr.hbm [resolvable:$true] %s45
      %s47 = sshll.u32 [#allocation7], 4
      %s48 = int_to_ptr.vmem [resolvable:$true] %s47
      %53 = dma.hbm_to_vmem [thread:$0]  %s46, 1024, %s48, [#allocation6], 64, 64, 4
    $region13: #{tpu_custom_call.1} parent=1 // pred_fallthru
      _
    // Predicated region
    $region14: #{tpu_custom_call.1} parent=1 // pred_check
      _
    $region15: #{tpu_custom_call.1} parent=1 // pred_check_branch
      %55 = sbr.rel (0) target = $region17
    $region16: #{tpu_custom_call.1} parent=1 // pred_region
      _
    $region17: #{tpu_custom_call.1} parent=1 // pred_fallthru
      _
    // Predicated region
    $region18: #{tpu_custom_call.1} parent=1 // pred_check
      _
    $region19: #{tpu_custom_call.1} parent=1 // pred_check_branch
      %57 = sbr.rel (0) target = $region21
    $region20: #{tpu_custom_call.1} parent=1 // pred_region
      %59 = vsyncadd [#allocation9], 0
      %s60 = sshll.u32 %s4, 4
      %s61 = int_to_ptr.hbm [resolvable:$true] %s60
      %s62 = sshll.u32 [#allocation8], 4
      %s63 = int_to_ptr.vmem [resolvable:$true] %s62
      %68 = dma.hbm_to_vmem [thread:$0]  %s61, 1024, %s63, [#allocation9], 64, 64, 4
    $region21: #{tpu_custom_call.1} parent=1 // pred_fallthru
      _
    // Predicated region
    $region22: #{tpu_custom_call.1} parent=1 // pred_check
      _
    $region23: #{tpu_custom_call.1} parent=1 // pred_check_branch
      %70 = sbr.rel (0) target = $region25
    $region24: #{tpu_custom_call.1} parent=1 // pred_region
      _
    $region25: #{tpu_custom_call.1} parent=1 // pred_fallthru
      _
    // Predicated region
    $region26: #{tpu_custom_call.1} parent=1 // pred_check
      _
    $region27: #{tpu_custom_call.1} parent=1 // pred_check_branch
      %72 = sbr.rel (0) target = $region29
    $region28: #{tpu_custom_call.1} parent=1 // pred_region
      %74 = dma.done [#allocation3], 128
    $region29: #{tpu_custom_call.1} parent=1 // pred_fallthru
      _
    // Predicated region
    $region30: #{tpu_custom_call.1} parent=1 // pred_check
      _
    $region31: #{tpu_custom_call.1} parent=1 // pred_check_branch
      %76 = sbr.rel (0) target = $region33
    $region32: #{tpu_custom_call.1} parent=1 // pred_region
      %78 = dma.done [#allocation6], 128
    $region33: #{tpu_custom_call.1} parent=1 // pred_fallthru
      _
    // Predicated region
    $region34: #{tpu_custom_call.1} parent=1 // pred_check
      _
    $region35: #{tpu_custom_call.1} parent=1 // pred_check_branch
      %80 = sbr.rel (0) target = $region37
    $region36: #{tpu_custom_call.1} parent=1 // pred_region
      %82 = dma.done [#allocation6], 1024
    $region37: #{tpu_custom_call.1} parent=1 // pred_fallthru
      _
    // Predicated region
    $region38: #{tpu_custom_call.1} parent=1 // pred_check
      _
    $region39: #{tpu_custom_call.1} parent=1 // pred_check_branch
      %84 = sbr.rel (0) target = $region41
    $region40: #{tpu_custom_call.1} parent=1 // pred_region
      %86 = dma.done [#allocation9], 1024
    $region41: #{tpu_custom_call.1} parent=1 // pred_fallthru
      _
    %v88 = vld [vmem:[#allocation2] sm:$0xf]
    %v89 = vld [vmem:[#allocation2 + $0x4] sm:$0xf]
    %v90 = vld [vmem:[#allocation5] sm:$0xf]
    %v91 = vld [vmem:[#allocation5 + $0x4] sm:$0xf]
    %v92 = vld [vmem:[#allocation7] sm:$0xf]
    %v93 = vld [vmem:[#allocation7 + $0x4] sm:$0xf]
    %v94 = vld [vmem:[#allocation7 + $0x8] sm:$0xf]
    %v95 = vld [vmem:[#allocation7 + $0xc] sm:$0xf]
    %v96 = vld [vmem:[#allocation7 + $0x10] sm:$0xf]
    %v97 = vld [vmem:[#allocation7 + $0x14] sm:$0xf]
    %v98 = vld [vmem:[#allocation7 + $0x18] sm:$0xf]
    %v99 = vld [vmem:[#allocation7 + $0x1c] sm:$0xf]
    %v100 = vld [vmem:[#allocation7 + $0x20] sm:$0xf]
    %v101 = vld [vmem:[#allocation7 + $0x24] sm:$0xf]
    %v102 = vld [vmem:[#allocation7 + $0x28] sm:$0xf]
    %v103 = vld [vmem:[#allocation7 + $0x2c] sm:$0xf]
    %v104 = vld [vmem:[#allocation7 + $0x30] sm:$0xf]
    %v105 = vld [vmem:[#allocation7 + $0x34] sm:$0xf]
    %v106 = vld [vmem:[#allocation7 + $0x38] sm:$0xf]
    %v107 = vld [vmem:[#allocation7 + $0x3c] sm:$0xf]
    %v110 = vunpack.c.l.b16 %v90
    %v111 = vunpack.c.l.b16 %v91
    %v112 = vpack.c.b16 %v111, %v110
    %v130 = vunpack.c.l.b16 %v92
    %v131 = vunpack.c.l.b16 %v93
    %v132 = vunpack.c.l.b16 %v94
    %v133 = vunpack.c.l.b16 %v95
    %v134 = vunpack.c.l.b16 %v96
    %v135 = vunpack.c.l.b16 %v97
    %v136 = vunpack.c.l.b16 %v98
    %v137 = vunpack.c.l.b16 %v99
    %v138 = vunpack.c.l.b16 %v100
    %v139 = vunpack.c.l.b16 %v101
    %v140 = vunpack.c.l.b16 %v102
    %v141 = vunpack.c.l.b16 %v103
    %v142 = vunpack.c.l.b16 %v104
    %v143 = vunpack.c.l.b16 %v105
    %v144 = vunpack.c.l.b16 %v106
    %v145 = vunpack.c.l.b16 %v107
    %v146 = vpack.c.b16 %v131, %v130
    %v147 = vpack.c.b16 %v133, %v132
    %v148 = vpack.c.b16 %v135, %v134
    %v149 = vpack.c.b16 %v137, %v136
    %v150 = vpack.c.b16 %v139, %v138
    %v151 = vpack.c.b16 %v141, %v140
    %v152 = vpack.c.b16 %v143, %v142
    %v153 = vpack.c.b16 %v145, %v144
    %162 = vmatpush.bf16.msra.mxu0 %v153
    %163 = vmatpush.bf16.msra.mxu0 %v152
    %164 = vmatpush.bf16.msra.mxu0 %v151
    %165 = vmatpush.bf16.msra.mxu0 %v150
    %166 = vmatpush.bf16.msra.mxu0 %v149
    %167 = vmatpush.bf16.msra.mxu0 %v148
    %168 = vmatpush.bf16.msra.mxu0 %v147
    %169 = vmatpush.bf16.msra.mxu0 %v146
    %170 = vmatmul.bf16.gmra.mxu0 %v112
    %v171 = vpop.f32.mrf.mxu0
    %v172 = vadd.f32 0.0, %v171
    %v173 = vpop.f32.mrf.mxu0
    %v174 = vadd.f32 0.0, %v173
    %175 = vdwg.mxu0
    %v176 = vpack.c.bf16 %v174, %v172
    %v177 = vld [vmem:[%s3] sm:$0x1]
    %v179 = vperm.slane %v177, 0
    %v183 = vunpack.c.l.b16 %v88
    %v184 = vunpack.c.l.b16 %v89
    %v185 = vpack.c.b16 %v184, %v183
    %vm186 = vcmask 130048
    %v188 = vsel %vm186, %v185, 0
    %190 = vmatpush.bf16.msra.mxu0 0
    %191 = vmatpush.bf16.msra.mxu0 0
    %192 = vmatpush.bf16.msra.mxu0 0
    %193 = vmatpush.bf16.msra.mxu0 0
    %194 = vmatpush.bf16.msra.mxu0 0
    %195 = vmatpush.bf16.msra.mxu0 0
    %196 = vmatpush.bf16.msra.mxu0 0
    %197 = vmatpush.bf16.msra.mxu0 %v176
    %198 = vmatmul.bf16.gmra.mxu0 %v188
    %v199 = vpop.f32.mrf.mxu0
    %v200 = vadd.f32 %v179, %v199
    %v201 = vpop.f32.mrf.mxu0
    %v202 = vadd.f32 %v179, %v201
    %203 = vdwg.mxu0
    %v204 = vmax.f32 %v200, 0.0
    %v205 = vmax.f32 %v202, 0.0
    %v206 = vpack.c.bf16 %v205, %v204
    %v207 = vld [vmem:[#allocation8] sm:$0xf]
    %v208 = vld [vmem:[#allocation8 + $0x4] sm:$0xf]
    %v209 = vld [vmem:[#allocation8 + $0x8] sm:$0xf]
    %v210 = vld [vmem:[#allocation8 + $0xc] sm:$0xf]
    %v211 = vld [vmem:[#allocation8 + $0x10] sm:$0xf]
    %v212 = vld [vmem:[#allocation8 + $0x14] sm:$0xf]
    %v213 = vld [vmem:[#allocation8 + $0x18] sm:$0xf]
    %v214 = vld [vmem:[#allocation8 + $0x1c] sm:$0xf]
    %v215 = vld [vmem:[#allocation8 + $0x20] sm:$0xf]
    %v216 = vld [vmem:[#allocation8 + $0x24] sm:$0xf]
    %v217 = vld [vmem:[#allocation8 + $0x28] sm:$0xf]
    %v218 = vld [vmem:[#allocation8 + $0x2c] sm:$0xf]
    %v219 = vld [vmem:[#allocation8 + $0x30] sm:$0xf]
    %v220 = vld [vmem:[#allocation8 + $0x34] sm:$0xf]
    %v221 = vld [vmem:[#allocation8 + $0x38] sm:$0xf]
    %v222 = vld [vmem:[#allocation8 + $0x3c] sm:$0xf]
    %v239 = vunpack.c.l.b16 %v207
    %v240 = vunpack.c.l.b16 %v208
    %v241 = vunpack.c.l.b16 %v209
    %v242 = vunpack.c.l.b16 %v210
    %v243 = vunpack.c.l.b16 %v211
    %v244 = vunpack.c.l.b16 %v212
    %v245 = vunpack.c.l.b16 %v213
    %v246 = vunpack.c.l.b16 %v214
    %v247 = vunpack.c.l.b16 %v215
    %v248 = vunpack.c.l.b16 %v216
    %v249 = vunpack.c.l.b16 %v217
    %v250 = vunpack.c.l.b16 %v218
    %v251 = vunpack.c.l.b16 %v219
    %v252 = vunpack.c.l.b16 %v220
    %v253 = vunpack.c.l.b16 %v221
    %v254 = vunpack.c.l.b16 %v222
    %v255 = vpack.c.b16 %v240, %v239
    %v256 = vpack.c.b16 %v242, %v241
    %v257 = vpack.c.b16 %v244, %v243
    %v258 = vpack.c.b16 %v246, %v245
    %v259 = vpack.c.b16 %v248, %v247
    %v260 = vpack.c.b16 %v250, %v249
    %v261 = vpack.c.b16 %v252, %v251
    %v262 = vpack.c.b16 %v254, %v253
    %271 = vmatpush.bf16.msra.mxu0 %v262
    %272 = vmatpush.bf16.msra.mxu0 %v261
    %273 = vmatpush.bf16.msra.mxu0 %v260
    %274 = vmatpush.bf16.msra.mxu0 %v259
    %275 = vmatpush.bf16.msra.mxu0 %v258
    %276 = vmatpush.bf16.msra.mxu0 %v257
    %277 = vmatpush.bf16.msra.mxu0 %v256
    %278 = vmatpush.bf16.msra.mxu0 %v255
    %279 = vmatmul.bf16.gmra.mxu0 %v206
    %v280 = vpop.f32.mrf.mxu0
    %v281 = vadd.f32 0.0, %v280
    %v282 = vpop.f32.mrf.mxu0
    %v283 = vadd.f32 0.0, %v282
    %284 = vdwg.mxu0
    %v285 = vpack.c.bf16 %v283, %v281
    %v286 = vld [vmem:[%s5] sm:$0x1]
    %v288 = vperm.slane %v286, 0
    %290 = vmatpush.bf16.msra.mxu0 0
    %291 = vmatpush.bf16.msra.mxu0 0
    %292 = vmatpush.bf16.msra.mxu0 0
    %293 = vmatpush.bf16.msra.mxu0 0
    %294 = vmatpush.bf16.msra.mxu0 0
    %295 = vmatpush.bf16.msra.mxu0 0
    %296 = vmatpush.bf16.msra.mxu0 0
    %297 = vmatpush.bf16.msra.mxu0 %v285
    %298 = vmatmul.bf16.gmra.mxu0 %v188
    %v299 = vpop.f32.mrf.mxu0
    %v300 = vadd.f32 %v288, %v299
    %v301 = vpop.f32.mrf.mxu0
    %v302 = vadd.f32 %v288, %v301
    %303 = vdwg.mxu0
    %304 = vst [vmem:[#allocation10] sm:$0xff] %v300
    %305 = vst [vmem:[#allocation10 + $0x8] sm:$0xff] %v302
    // Predicated region
    $region42: #{tpu_custom_call.1} parent=1 // pred_check
      _
    $region43: #{tpu_custom_call.1} parent=1 // pred_check_branch
      %307 = sbr.rel (0) target = $region45
    $region44: #{tpu_custom_call.1} parent=1 // pred_region
      %309 = vsyncadd [#allocation4], 0
      %s310 = sshll.u32 [#allocation10], 4
      %s311 = int_to_ptr.vmem [resolvable:$true] %s310
      %s312 = sshll.u32 %s6, 4
      %s313 = int_to_ptr.hbm [resolvable:$true] %s312
      %318 = dma.vmem_to_hbm [thread:$0]  %s311, 256, %s313, [#allocation4], 128, 128, 8
    $region45: #{tpu_custom_call.1} parent=1 // pred_fallthru
      _
    // Predicated region
    $region46: #{tpu_custom_call.1} parent=1 // pred_check
      _
    $region47: #{tpu_custom_call.1} parent=1 // pred_check_branch
      %320 = sbr.rel (0) target = $region49
    $region48: #{tpu_custom_call.1} parent=1 // pred_region
      %322 = dma.done [#allocation4], 256
    $region49: #{tpu_custom_call.1} parent=1 // pred_fallthru
      _
    %323 = vsyncpa [#allocation3], 1
    %324 = vsyncpa [#allocation6], 1
    %325 = vsyncpa [#allocation9], 1
    %326 = vsyncpa [#allocation4], 1

</llo_original>
